<compile_context>
chip_gen: v5e
topology: v5e:2x2
jax: 0.10.0
libtpu: 0.0.40
codegen_flags: <defaults>
</compile_context>

<pallas_src>
import math

import jax
import jax.numpy as jnp
from jax.experimental import pallas as pl
from jax.experimental.pallas import tpu as pltpu


def _round_up(x, m):
    return ((x + m - 1) // m) * m


def gpt2_mlp_kernel(x_ref, wfc_ref, bfc_ref, wproj_ref, bproj_ref, o_ref, acc_ref):
    ff = pl.program_id(1)

    @pl.when(ff == 0)
    def _init():
        acc_ref[...] = jnp.zeros_like(acc_ref)

    # c_fc slice: (TM, H) @ (H, TFF) -> (TM, TFF); bf16 operands, f32 accumulate.
    x = x_ref[...].astype(jnp.bfloat16)
    h = jnp.dot(x, wfc_ref[...], preferred_element_type=jnp.float32)
    h = h + bfc_ref[...]                                   # (1, TFF) f32 broadcast

    # Exact (erf) GELU in f32 — matches torch.nn.GELU() default.
    inv_sqrt2 = jnp.float32(0.7071067811865476)
    h = 0.5 * h * (1.0 + jax.lax.erf(h * inv_sqrt2))

    # c_proj slice: (TM, TFF) @ (TFF, H) -> accumulate into f32 scratch.
    acc_ref[...] += jnp.dot(h.astype(jnp.bfloat16), wproj_ref[...],
                            preferred_element_type=jnp.float32)

    @pl.when(ff == pl.num_programs(1) - 1)
    def _finalize():
        o_ref[...] = (acc_ref[...] + bproj_ref[...]).astype(o_ref.dtype)


def gpt2_mlp(hidden_states, wfc, bfc, wproj, bproj, *, tile_m=256, tile_ff=None):
    """Fused GPT2MLP forward.

    hidden_states: [B, S, H] float32
    wfc:   [H, I] (c_fc weight, pre-transposed so the op is x @ Wfc)
    bfc:   [I]
    wproj: [I, H] (c_proj weight, pre-transposed)
    bproj: [H]
    """
    B, S, H = hidden_states.shape
    Hw, I = wfc.shape
    assert Hw == H and wproj.shape == (I, H)
    assert bfc.shape == (I,) and bproj.shape == (H,)

    M = B * S

    # Token tiling: large tiles feed the MXU; clamp / pad for small inputs.
    tile_m = min(tile_m, _round_up(M, 8))
    tile_m = _round_up(tile_m, 8)
    M_pad = _round_up(M, tile_m)

    # Inner (intermediate) dimension chunking. Default: weights fully resident.
    if tile_ff is None:
        tile_ff = I
    assert I % tile_ff == 0
    n_ff = I // tile_ff
    constant_weights = (n_ff == 1)

    x2d = hidden_states.reshape(M, H)
    if M_pad != M:
        x2d = jnp.pad(x2d, ((0, M_pad - M), (0, 0)))

    # Cast weights once for bf16 MXU matmuls; biases stay f32 (added post-accum).
    wfc_b = wfc.astype(jnp.bfloat16)
    wproj_b = wproj.astype(jnp.bfloat16)
    bfc2d = bfc.astype(jnp.float32).reshape(1, I)
    bproj2d = bproj.astype(jnp.float32).reshape(1, H)

    # Single-buffer the weight blocks when they are grid-invariant (resident).
    w_mode = dict(pipeline_mode=pl.Buffered(1)) if constant_weights else {}

    in_specs = [
        pl.BlockSpec((tile_m, H), lambda i, f: (i, 0)),             # x tile
        pl.BlockSpec((H, tile_ff), lambda i, f: (0, f), **w_mode),  # Wfc
        pl.BlockSpec((1, tile_ff), lambda i, f: (0, f)),            # bfc
        pl.BlockSpec((tile_ff, H), lambda i, f: (f, 0), **w_mode),  # Wproj
        pl.BlockSpec((1, H), lambda i, f: (0, 0)),                  # bproj
    ]
    out_spec = pl.BlockSpec((tile_m, H), lambda i, f: (i, 0))

    # VMEM budget: weight blocks + double-buffered activation tiles + accumulator.
    w_buf = 1 if constant_weights else 2
    needed = (
        w_buf * 2 * (H * tile_ff + tile_ff * H)   # bf16 weight blocks
        + 2 * 4 * (tile_ff + H)                   # bias blocks (f32)
        + 2 * 4 * tile_m * H                      # x tiles (f32, double-buffered)
        + 2 * 4 * tile_m * H                      # out tiles (f32, double-buffered)
        + 4 * tile_m * H                          # f32 accumulator scratch
        + 4 * tile_m * tile_ff                    # f32 intermediate h
    )
    vmem_limit = int(min(max(needed * 3 // 2, 32 * 1024 * 1024),
                         64 * 1024 * 1024))

    out2d = pl.pallas_call(
        gpt2_mlp_kernel,
        out_shape=jax.ShapeDtypeStruct((M_pad, H), hidden_states.dtype),
        grid=(M_pad // tile_m, n_ff),
        in_specs=in_specs,
        out_specs=out_spec,
        scratch_shapes=[pltpu.VMEM((tile_m, H), jnp.float32)],
        compiler_params=pltpu.CompilerParams(
            dimension_semantics=("parallel", "arbitrary"),
            vmem_limit_bytes=vmem_limit,
        ),
    )(x2d, wfc_b, bfc2d, wproj_b, bproj2d)

    if M_pad != M:
        out2d = out2d[:M]
    return out2d.reshape(B, S, H)


def reference_mlp(hidden_states, wfc, bfc, wproj, bproj):
    """Pure-JAX reference matching the kernel numerics (bf16 matmul operands,
    f32 accumulation, exact erf GELU)."""
    B, S, H = hidden_states.shape
    x = hidden_states.reshape(-1, H).astype(jnp.bfloat16)
    h = jnp.dot(x, wfc.astype(jnp.bfloat16),
                preferred_element_type=jnp.float32) + bfc
    h = 0.5 * h * (1.0 + jax.lax.erf(h * jnp.float32(0.7071067811865476)))
    y = jnp.dot(h.astype(jnp.bfloat16), wproj.astype(jnp.bfloat16),
                preferred_element_type=jnp.float32) + bproj
    return y.reshape(B, S, H).astype(hidden_states.dtype)


if __name__ == "__main__":
    # Shapes implied by the module: [batch, seq, n_hidden_size].
    # H is a multiple of 128 so the self-test exercises real lane tiling.
    B, S, H = 2, 8, 128
    key = jax.random.PRNGKey(0)
    k_x, k_wfc, k_bfc, k_wp, k_bp = jax.random.split(key, 5)

    x = jax.random.normal(k_x, (B, S, H), dtype=jnp.float32)

    # nn.Linear(H, H) params: PyTorch computes y = x @ W.T + b; we store the
    # transposed weight so the kernel does x @ W.
    bound = 1.0 / math.sqrt(H)
    wfc_t = jax.random.uniform(k_wfc, (H, H), jnp.float32, -bound, bound)   # = W_fc.T
    bfc = jax.random.uniform(k_bfc, (H,), jnp.float32, -bound, bound)
    wproj_t = jax.random.uniform(k_wp, (H, H), jnp.float32, -bound, bound)  # = W_proj.T
    bproj = jax.random.uniform(k_bp, (H,), jnp.float32, -bound, bound)

    out = gpt2_mlp(x, wfc_t, bfc, wproj_t, bproj)
    out = jax.block_until_ready(out)

    ref = reference_mlp(x, wfc_t, bfc, wproj_t, bproj)
    assert out.shape == (B, S, H)
    max_err = float(jnp.max(jnp.abs(out - ref)))
    assert jnp.allclose(out, ref, atol=2e-2, rtol=2e-2), (
        f"mismatch vs reference (max abs err {max_err})")

    print("KERNEL_OK")
</pallas_src>

<mosaic_0001>
module attributes {stable_mosaic.version = 11 : i64} {
  func.func @gpt2_mlp_kernel(%arg0: i32, %arg1: i32, %arg2: memref<16x128xf32, #tpu.memory_space<vmem>>, %arg3: memref<128x128xbf16, #tpu.memory_space<vmem>>, %arg4: memref<1x128xf32, #tpu.memory_space<vmem>>, %arg5: memref<128x128xbf16, #tpu.memory_space<vmem>>, %arg6: memref<1x128xf32, #tpu.memory_space<vmem>>, %arg7: memref<16x128xf32, #tpu.memory_space<vmem>>, %arg8: memref<16x128xf32, #tpu.memory_space<vmem>>) attributes {dimension_semantics = [#tpu.dimension_semantics<parallel>, #tpu.dimension_semantics<arbitrary>], iteration_bounds = array<i64: 1, 1>, scalar_prefetch = 0 : i64, scratch_operands = 1 : i64, tpu.core_type = #tpu.core_type<tc>, window_params = [{transform_indices = @transform_0, window_bounds = array<i64: 16, 128>}, {pipeline_mode = #tpu.pipeline_mode<synchronous>, transform_indices = @transform_1, window_bounds = array<i64: 128, 128>}, {transform_indices = @transform_2, window_bounds = array<i64: 1, 128>}, {pipeline_mode = #tpu.pipeline_mode<synchronous>, transform_indices = @transform_3, window_bounds = array<i64: 128, 128>}, {pipeline_mode = #tpu.pipeline_mode<synchronous>, transform_indices = @transform_4, window_bounds = array<i64: 1, 128>}, {transform_indices = @transform_5, window_bounds = array<i64: 16, 128>}]} {
    %c0_i32 = arith.constant 0 : i32
    %0 = arith.cmpi eq, %arg1, %c0_i32 : i32
    %1 = arith.extui %0 : i1 to i32
    %c0_i32_0 = arith.constant 0 : i32
    %2 = arith.cmpi ne, %1, %c0_i32_0 : i32
    scf.if %2 {
      %cst_18 = arith.constant 0.000000e+00 : f32
      %27 = vector.broadcast %cst_18 : f32 to vector<16x128xf32>
      %c0_19 = arith.constant 0 : index
      %c0_20 = arith.constant 0 : index
      %28 = vector.load %arg8[%c0_19, %c0_20] : memref<16x128xf32, #tpu.memory_space<vmem>>, vector<16x128xf32>
      tpu.vector_store %arg8[%c0_19, %c0_20], %27 {strides = array<i32>} : memref<16x128xf32, #tpu.memory_space<vmem>>, vector<16x128xf32>,
    } else {
    }
    %c0 = arith.constant 0 : index
    %c0_1 = arith.constant 0 : index
    %3 = vector.load %arg2[%c0, %c0_1] : memref<16x128xf32, #tpu.memory_space<vmem>>, vector<16x128xf32>
    %4 = arith.truncf %3 : vector<16x128xf32> to vector<16x128xbf16>
    %c0_2 = arith.constant 0 : index
    %c0_3 = arith.constant 0 : index
    %5 = vector.load %arg3[%c0_2, %c0_3] : memref<128x128xbf16, #tpu.memory_space<vmem>>, vector<128x128xbf16>
    %cst = arith.constant dense<0.000000e+00> : vector<16x128xf32>
    %6 = tpu.matmul %4, %5, %cst {dimension_numbers = #tpu.dot_dimension_numbers<[1], [0], [0], [1], [0, 0, 1, 1], [], []>} : vector<16x128xbf16>, vector<128x128xbf16>, vector<16x128xf32> -> vector<16x128xf32>
    %c0_4 = arith.constant 0 : index
    %c0_5 = arith.constant 0 : index
    %7 = vector.load %arg4[%c0_4, %c0_5] : memref<1x128xf32, #tpu.memory_space<vmem>>, vector<1x128xf32>
    %8 = vector.broadcast %7 : vector<1x128xf32> to vector<16x128xf32>
    %9 = arith.addf %6, %8 : vector<16x128xf32>
    %cst_6 = arith.constant 5.000000e-01 : f32
    %10 = vector.broadcast %cst_6 : f32 to vector<16x128xf32>
    %11 = arith.mulf %10, %9 : vector<16x128xf32>
    %cst_7 = arith.constant 0.707106769 : f32
    %12 = vector.broadcast %cst_7 : f32 to vector<16x128xf32>
    %13 = arith.mulf %9, %12 : vector<16x128xf32>
    %14 = math.erf %13 : vector<16x128xf32>
    %cst_8 = arith.constant 1.000000e+00 : f32
    %15 = vector.broadcast %cst_8 : f32 to vector<16x128xf32>
    %16 = arith.addf %15, %14 : vector<16x128xf32>
    %17 = arith.mulf %11, %16 : vector<16x128xf32>
    %c0_9 = arith.constant 0 : index
    %c0_10 = arith.constant 0 : index
    %18 = vector.load %arg8[%c0_9, %c0_10] : memref<16x128xf32, #tpu.memory_space<vmem>>, vector<16x128xf32>
    %19 = arith.truncf %17 : vector<16x128xf32> to vector<16x128xbf16>
    %c0_11 = arith.constant 0 : index
    %c0_12 = arith.constant 0 : index
    %20 = vector.load %arg5[%c0_11, %c0_12] : memref<128x128xbf16, #tpu.memory_space<vmem>>, vector<128x128xbf16>
    %cst_13 = arith.constant dense<0.000000e+00> : vector<16x128xf32>
    %21 = tpu.matmul %19, %20, %cst_13 {dimension_numbers = #tpu.dot_dimension_numbers<[1], [0], [0], [1], [0, 0, 1, 1], [], []>} : vector<16x128xbf16>, vector<128x128xbf16>, vector<16x128xf32> -> vector<16x128xf32>
    %22 = arith.addf %18, %21 : vector<16x128xf32>
    %c0_14 = arith.constant 0 : index
    %c0_15 = arith.constant 0 : index
    %23 = vector.load %arg8[%c0_14, %c0_15] : memref<16x128xf32, #tpu.memory_space<vmem>>, vector<16x128xf32>
    tpu.vector_store %arg8[%c0_14, %c0_15], %22 {strides = array<i32>} : memref<16x128xf32, #tpu.memory_space<vmem>>, vector<16x128xf32>,
    %c0_i32_16 = arith.constant 0 : i32
    %24 = arith.cmpi eq, %arg1, %c0_i32_16 : i32
    %25 = arith.extui %24 : i1 to i32
    %c0_i32_17 = arith.constant 0 : i32
    %26 = arith.cmpi ne, %25, %c0_i32_17 : i32
    scf.if %26 {
      %c0_18 = arith.constant 0 : index
      %c0_19 = arith.constant 0 : index
      %27 = vector.load %arg8[%c0_18, %c0_19] : memref<16x128xf32, #tpu.memory_space<vmem>>, vector<16x128xf32>
      %c0_20 = arith.constant 0 : index
      %c0_21 = arith.constant 0 : index
      %28 = vector.load %arg6[%c0_20, %c0_21] : memref<1x128xf32, #tpu.memory_space<vmem>>, vector<1x128xf32>
      %29 = vector.broadcast %28 : vector<1x128xf32> to vector<16x128xf32>
      %30 = arith.addf %27, %29 : vector<16x128xf32>
      %c0_22 = arith.constant 0 : index
      %c0_23 = arith.constant 0 : index
      %31 = vector.load %arg7[%c0_22, %c0_23] : memref<16x128xf32, #tpu.memory_space<vmem>>, vector<16x128xf32>
      tpu.vector_store %arg7[%c0_22, %c0_23], %30 {strides = array<i32>} : memref<16x128xf32, #tpu.memory_space<vmem>>, vector<16x128xf32>,
    } else {
    }
    return
  }
  func.func @transform_0(%arg0: i32, %arg1: i32) -> (i32, i32) {
    %c0_i32 = arith.constant 0 : i32
    %c0_i32_0 = arith.constant 0 : i32
    return %arg0, %c0_i32 : i32, i32
  }
  func.func @transform_1(%arg0: i32, %arg1: i32) -> (i32, i32) {
    %c0_i32 = arith.constant 0 : i32
    %c0_i32_0 = arith.constant 0 : i32
    return %c0_i32, %arg1 : i32, i32
  }
  func.func @transform_2(%arg0: i32, %arg1: i32) -> (i32, i32) {
    %c0_i32 = arith.constant 0 : i32
    %c0_i32_0 = arith.constant 0 : i32
    return %c0_i32, %arg1 : i32, i32
  }
  func.func @transform_3(%arg0: i32, %arg1: i32) -> (i32, i32) {
    %c0_i32 = arith.constant 0 : i32
    %c0_i32_0 = arith.constant 0 : i32
    return %arg1, %c0_i32 : i32, i32
  }
  func.func @transform_4(%arg0: i32, %arg1: i32) -> (i32, i32) {
    %c0_i32 = arith.constant 0 : i32
    %c0_i32_0 = arith.constant 0 : i32
    %c0_i32_1 = arith.constant 0 : i32
    return %c0_i32, %c0_i32_0 : i32, i32
  }
  func.func @transform_5(%arg0: i32, %arg1: i32) -> (i32, i32) {
    %c0_i32 = arith.constant 0 : i32
    %c0_i32_0 = arith.constant 0 : i32
    return %arg0, %c0_i32 : i32, i32
  }
}

</mosaic_0001>

<llo_original>
// kernel: tpu_custom_call.1
$region0: #{tpu_custom_call.1}
  #allocation0 [shape = 'u32[]', space=smem, size = 0x4, offset = 0x4, fixed_abs, tag = 'smem constant byte address 0x4 - core index']
  #allocation1 [shape = 'u32[72,128]{1,0:T(1,128)}', space=vmem, size = 0x9000, scoped, tag = 'internal scratch']
  #allocation2 [shape = 'f32[16,128]{1,0:T(8,128)}', space=vmem, size = 0x2000, scoped, tag = 'scratch operand']
  %s0 = inlined_call_operand.hbm [shape: f32[16,128], index: 0, kind: input, shape index: {}]
  %s1 = inlined_call_operand.hbm [shape: bf16[128,128], index: 1, kind: input, shape index: {}]
  %s2 = inlined_call_operand.vmem [shape: f32[1,128], index: 2, kind: input, shape index: {}]
  %s3 = inlined_call_operand.hbm [shape: bf16[128,128], index: 3, kind: input, shape index: {}]
  %s4 = inlined_call_operand.vmem [shape: f32[1,128], index: 4, kind: input, shape index: {}]
  %s5 = inlined_call_operand.hbm [shape: f32[16,128], index: 5, kind: output, shape index: {}]
  %s6 = sld [smem:[#allocation0]]
  $region50: #{tpu_custom_call.1} parent=0
    _
  %s8 = ssub.s32 1, %s6
  %s9 = scalar_select 0, %s8, %s6
  $region1: #{tpu_custom_call.1} parent=0
    #allocation3 [shape = 'u8[8192]{0}', space=vmem, size = 0x2000, scoped, tag = 'input window, operand 0, single buffered']
    #allocation4 [shape = 's32[1]{0}', space=sflag, size = 0x4, scoped, tag = 'scoped memory for tpu_custom_call.1']
    #allocation5 [shape = 's32[1]{0}', space=sflag, size = 0x4, scoped, tag = 'scoped memory for tpu_custom_call.1']
    #allocation6 [shape = 'u8[32768]{0}', space=vmem, size = 0x8000, scoped, tag = 'input window, operand 1, single buffered']
    #allocation7 [shape = 's32[1]{0}', space=sflag, size = 0x4, scoped, tag = 'scoped memory for tpu_custom_call.1']
    #allocation8 [shape = 'u8[32768]{0}', space=vmem, size = 0x8000, scoped, tag = 'input window, operand 3, single buffered']
    #allocation9 [shape = 'u8[8192]{0}', space=vmem, size = 0x2000, scoped, tag = 'output window, operand 0, single buffered']
    %10 = vsyncpa [#allocation4], 0
    %11 = vsyncpa [#allocation7], 0
    %12 = vsyncpa [#allocation5], 0
    // Predicated region
    $region2: #{tpu_custom_call.1} parent=1 // pred_check
      _
    $region3: #{tpu_custom_call.1} parent=1 // pred_check_branch
      %14 = sbr.rel (0) target = $region5
    $region4: #{tpu_custom_call.1} parent=1 // pred_region
      %16 = vsyncadd [#allocation4], 0
      %s17 = sshll.u32 %s0, 4
      %s18 = int_to_ptr.hbm [resolvable:$true] %s17
      %s19 = sshll.u32 [#allocation3], 4
      %s20 = int_to_ptr.vmem [resolvable:$true] %s19
      %25 = dma.hbm_to_vmem [thread:$0]  %s18, 256, %s20, [#allocation4], 128, 128, 8
    $region5: #{tpu_custom_call.1} parent=1 // pred_fallthru
      _
    // Predicated region
    $region6: #{tpu_custom_call.1} parent=1 // pred_check
      _
    $region7: #{tpu_custom_call.1} parent=1 // pred_check_branch
      %27 = sbr.rel (0) target = $region9
    $region8: #{tpu_custom_call.1} parent=1 // pred_region
      %29 = vsyncadd [#allocation7], 0
      %s30 = sshll.u32 %s1, 4
      %s31 = int_to_ptr.hbm [resolvable:$true] %s30
      %s32 = sshll.u32 [#allocation6], 4
      %s33 = int_to_ptr.vmem [resolvable:$true] %s32
      %38 = dma.hbm_to_vmem [thread:$0]  %s31, 1024, %s33, [#allocation7], 64, 64, 4
    $region9: #{tpu_custom_call.1} parent=1 // pred_fallthru
      _
    // Predicated region
    $region10: #{tpu_custom_call.1} parent=1 // pred_check
      _
    $region11: #{tpu_custom_call.1} parent=1 // pred_check_branch
      %40 = sbr.rel (0) target = $region13
    $region12: #{tpu_custom_call.1} parent=1 // pred_region
      _
    $region13: #{tpu_custom_call.1} parent=1 // pred_fallthru
      _
    // Predicated region
    $region14: #{tpu_custom_call.1} parent=1 // pred_check
      _
    $region15: #{tpu_custom_call.1} parent=1 // pred_check_branch
      %42 = sbr.rel (0) target = $region17
    $region16: #{tpu_custom_call.1} parent=1 // pred_region
      %44 = vsyncadd [#allocation7], 0
      %s45 = sshll.u32 %s3, 4
      %s46 = int_to_ptr.hbm [resolvable:$true] %s45
      %s47 = sshll.u32 [#allocation8], 4
      %s48 = int_to_ptr.vmem [resolvable:$true] %s47
      %53 = dma.hbm_to_vmem [thread:$0]  %s46, 1024, %s48, [#allocation7], 64, 64, 4
    $region17: #{tpu_custom_call.1} parent=1 // pred_fallthru
      _
    // Predicated region
    $region18: #{tpu_custom_call.1} parent=1 // pred_check
      _
    $region19: #{tpu_custom_call.1} parent=1 // pred_check_branch
      %55 = sbr.rel (0) target = $region21
    $region20: #{tpu_custom_call.1} parent=1 // pred_region
      _
    $region21: #{tpu_custom_call.1} parent=1 // pred_fallthru
      _
    // Predicated region
    $region22: #{tpu_custom_call.1} parent=1 // pred_check
      _
    $region23: #{tpu_custom_call.1} parent=1 // pred_check_branch
      %57 = sbr.rel (0) target = $region25
    $region24: #{tpu_custom_call.1} parent=1 // pred_region
      %59 = dma.done [#allocation4], 256
    $region25: #{tpu_custom_call.1} parent=1 // pred_fallthru
      _
    // Predicated region
    $region26: #{tpu_custom_call.1} parent=1 // pred_check
      _
    $region27: #{tpu_custom_call.1} parent=1 // pred_check_branch
      %61 = sbr.rel (0) target = $region29
    $region28: #{tpu_custom_call.1} parent=1 // pred_region
      %63 = dma.done [#allocation7], 1024
    $region29: #{tpu_custom_call.1} parent=1 // pred_fallthru
      _
    // Predicated region
    $region30: #{tpu_custom_call.1} parent=1 // pred_check
      _
    $region31: #{tpu_custom_call.1} parent=1 // pred_check_branch
      %65 = sbr.rel (0) target = $region33
    $region32: #{tpu_custom_call.1} parent=1 // pred_region
      %67 = dma.done [#allocation7], 1024
    $region33: #{tpu_custom_call.1} parent=1 // pred_fallthru
      _
    %p68 = scmp.eq.s32.totalorder 0, 0
    // Predicated region
    $region34: #{tpu_custom_call.1} parent=1 // pred_check
      %p69 = pneg %p68
    $region35: #{tpu_custom_call.1} parent=1 // pred_check_branch
      %71 = sbr.rel (%p69) target = $region37
    $region36: #{tpu_custom_call.1} parent=1 // pred_region
      %72 = vst [vmem:[#allocation2] sm:$0xff] 0.0
      %73 = vst [vmem:[#allocation2 + $0x8] sm:$0xff] 0.0
    $region37: #{tpu_custom_call.1} parent=1 // pred_fallthru
      _
    %v74 = vld [vmem:[#allocation3] sm:$0xff]
    %v75 = vld [vmem:[#allocation3 + $0x8] sm:$0xff]
    %v76 = vpack.c.bf16 %v75, %v74
    %v77 = vld [vmem:[#allocation6] sm:$0xf]
    %v78 = vld [vmem:[#allocation6 + $0x4] sm:$0xf]
    %v79 = vld [vmem:[#allocation6 + $0x8] sm:$0xf]
    %v80 = vld [vmem:[#allocation6 + $0xc] sm:$0xf]
    %v81 = vld [vmem:[#allocation6 + $0x10] sm:$0xf]
    %v82 = vld [vmem:[#allocation6 + $0x14] sm:$0xf]
    %v83 = vld [vmem:[#allocation6 + $0x18] sm:$0xf]
    %v84 = vld [vmem:[#allocation6 + $0x1c] sm:$0xf]
    %v85 = vld [vmem:[#allocation6 + $0x20] sm:$0xf]
    %v86 = vld [vmem:[#allocation6 + $0x24] sm:$0xf]
    %v87 = vld [vmem:[#allocation6 + $0x28] sm:$0xf]
    %v88 = vld [vmem:[#allocation6 + $0x2c] sm:$0xf]
    %v89 = vld [vmem:[#allocation6 + $0x30] sm:$0xf]
    %v90 = vld [vmem:[#allocation6 + $0x34] sm:$0xf]
    %v91 = vld [vmem:[#allocation6 + $0x38] sm:$0xf]
    %v92 = vld [vmem:[#allocation6 + $0x3c] sm:$0xf]
    %v93 = vld [vmem:[%s2] sm:$0x1]
    %v95 = vperm.slane %v93, 0
    %v113 = vunpack.c.l.b16 %v77
    %v114 = vunpack.c.l.b16 %v78
    %v115 = vunpack.c.l.b16 %v79
    %v116 = vunpack.c.l.b16 %v80
    %v117 = vunpack.c.l.b16 %v81
    %v118 = vunpack.c.l.b16 %v82
    %v119 = vunpack.c.l.b16 %v83
    %v120 = vunpack.c.l.b16 %v84
    %v121 = vunpack.c.l.b16 %v85
    %v122 = vunpack.c.l.b16 %v86
    %v123 = vunpack.c.l.b16 %v87
    %v124 = vunpack.c.l.b16 %v88
    %v125 = vunpack.c.l.b16 %v89
    %v126 = vunpack.c.l.b16 %v90
    %v127 = vunpack.c.l.b16 %v91
    %v128 = vunpack.c.l.b16 %v92
    %v129 = vpack.c.b16 %v114, %v113
    %v130 = vpack.c.b16 %v116, %v115
    %v131 = vpack.c.b16 %v118, %v117
    %v132 = vpack.c.b16 %v120, %v119
    %v133 = vpack.c.b16 %v122, %v121
    %v134 = vpack.c.b16 %v124, %v123
    %v135 = vpack.c.b16 %v126, %v125
    %v136 = vpack.c.b16 %v128, %v127
    %145 = vmatpush.bf16.msra.mxu0 %v136
    %146 = vmatpush.bf16.msra.mxu0 %v135
    %147 = vmatpush.bf16.msra.mxu0 %v134
    %148 = vmatpush.bf16.msra.mxu0 %v133
    %149 = vmatpush.bf16.msra.mxu0 %v132
    %150 = vmatpush.bf16.msra.mxu0 %v131
    %151 = vmatpush.bf16.msra.mxu0 %v130
    %152 = vmatpush.bf16.msra.mxu0 %v129
    %153 = vmatmul.bf16.gmra.mxu0 %v76
    %v154 = vpop.f32.mrf.mxu0
    %v155 = vadd.f32 %v95, %v154
    %v156 = vpop.f32.mrf.mxu0
    %v157 = vadd.f32 %v95, %v156
    %158 = vdwg.mxu0
    %v159 = vmul.f32 %v155, 0.5
    %v160 = vmul.f32 %v157, 0.5
    %v161 = vmul.f32 %v155, 0.70710677
    %v162 = vmul.f32 %v157, 0.70710677
    %v163 = vmul.f32 %v161, %v161
    %v164 = vmin.f32 16.0, %v163
    %v165 = vmul.f32 %v164, 2.1237322e-06
    %v166 = vadd.f32 %v165, 0.00028619796
    %v167 = vmul.f32 %v164, %v166
    %v168 = vadd.f32 %v167, 0.0036580483
    %v169 = vmul.f32 %v164, %v168
    %v170 = vadd.f32 %v169, 0.05243302
    %v171 = vmul.f32 %v164, %v170
    %v172 = vadd.f32 %v171, 0.18741608
    %v173 = vmul.f32 %v164, %v172
    %v174 = vadd.f32 %v173, 1.1283791
    %v175 = vmul.f32 %v161, %v174
    %v176 = vmul.f32 %v164, 3.8918573e-05
    %v177 = vadd.f32 %v176, 0.001143296
    %v178 = vmul.f32 %v164, %v177
    %v179 = vadd.f32 %v178, 0.014752088
    %v180 = vmul.f32 %v164, %v179
    %v181 = vadd.f32 %v180, 0.112945676
    %v182 = vmul.f32 %v164, %v181
    %v183 = vadd.f32 %v182, 0.4994258
    %v184 = vmul.f32 %v164, %v183
    %v185 = vadd.f32 %v184, 1.0
    %v186 = vrcp.pop %v185
    %v187 = vmul.f32 %v185, %v186
    %v188 = vsub.f32 1.0, %v187
    %v189 = vmul.f32 %v186, %v188
    %v190 = vadd.f32 %v186, %v189
    %vm191 = vweird.f32 %v185
    %vm192 = vweird.f32 %v186
    %vm193 = vmor %vm191, %vm192
    %v194 = vsel %vm193, %v186, %v190
    %v195 = vand.u32 2147483647, %v185
    %vm196 = vcmp.eq.f32.partialorder %v195, 8.507059e+37
    %v197 = vand.u32 %v185, 2147483648
    %v198 = vor.u32 1.1754944e-38, %v197
    %v199 = vsel %vm196, %v198, %v194
    %v200 = vmul.f32 %v175, %v199
    %v201 = vmin.f32 %v200, 1.0
    %v202 = vmax.f32 %v201, -1.0
    %v203 = vmul.f32 %v162, %v162
    %v204 = vmin.f32 16.0, %v203
    %v205 = vmul.f32 %v204, 2.1237322e-06
    %v206 = vadd.f32 %v205, 0.00028619796
    %v207 = vmul.f32 %v204, %v206
    %v208 = vadd.f32 %v207, 0.0036580483
    %v209 = vmul.f32 %v204, %v208
    %v210 = vadd.f32 %v209, 0.05243302
    %v211 = vmul.f32 %v204, %v210
    %v212 = vadd.f32 %v211, 0.18741608
    %v213 = vmul.f32 %v204, %v212
    %v214 = vadd.f32 %v213, 1.1283791
    %v215 = vmul.f32 %v162, %v214
    %v216 = vmul.f32 %v204, 3.8918573e-05
    %v217 = vadd.f32 %v216, 0.001143296
    %v218 = vmul.f32 %v204, %v217
    %v219 = vadd.f32 %v218, 0.014752088
    %v220 = vmul.f32 %v204, %v219
    %v221 = vadd.f32 %v220, 0.112945676
    %v222 = vmul.f32 %v204, %v221
    %v223 = vadd.f32 %v222, 0.4994258
    %v224 = vmul.f32 %v204, %v223
    %v225 = vadd.f32 %v224, 1.0
    %v226 = vrcp.pop %v225
    %v227 = vmul.f32 %v225, %v226
    %v228 = vsub.f32 1.0, %v227
    %v229 = vmul.f32 %v226, %v228
    %v230 = vadd.f32 %v226, %v229
    %vm231 = vweird.f32 %v225
    %vm232 = vweird.f32 %v226
    %vm233 = vmor %vm231, %vm232
    %v234 = vsel %vm233, %v226, %v230
    %v235 = vand.u32 2147483647, %v225
    %vm236 = vcmp.eq.f32.partialorder %v235, 8.507059e+37
    %v237 = vand.u32 %v225, 2147483648
    %v238 = vor.u32 1.1754944e-38, %v237
    %v239 = vsel %vm236, %v238, %v234
    %v240 = vmul.f32 %v215, %v239
    %v241 = vmin.f32 %v240, 1.0
    %v242 = vmax.f32 %v241, -1.0
    %v243 = vadd.f32 %v202, 1.0
    %v244 = vadd.f32 %v242, 1.0
    %v245 = vmul.f32 %v159, %v243
    %v246 = vmul.f32 %v160, %v244
    %v247 = vld [vmem:[#allocation2] sm:$0xff]
    %v248 = vld [vmem:[#allocation2 + $0x8] sm:$0xff]
    %v249 = vpack.c.bf16 %v246, %v245
    %v250 = vld [vmem:[#allocation8] sm:$0xf]
    %v251 = vld [vmem:[#allocation8 + $0x4] sm:$0xf]
    %v252 = vld [vmem:[#allocation8 + $0x8] sm:$0xf]
    %v253 = vld [vmem:[#allocation8 + $0xc] sm:$0xf]
    %v254 = vld [vmem:[#allocation8 + $0x10] sm:$0xf]
    %v255 = vld [vmem:[#allocation8 + $0x14] sm:$0xf]
    %v256 = vld [vmem:[#allocation8 + $0x18] sm:$0xf]
    %v257 = vld [vmem:[#allocation8 + $0x1c] sm:$0xf]
    %v258 = vld [vmem:[#allocation8 + $0x20] sm:$0xf]
    %v259 = vld [vmem:[#allocation8 + $0x24] sm:$0xf]
    %v260 = vld [vmem:[#allocation8 + $0x28] sm:$0xf]
    %v261 = vld [vmem:[#allocation8 + $0x2c] sm:$0xf]
    %v262 = vld [vmem:[#allocation8 + $0x30] sm:$0xf]
    %v263 = vld [vmem:[#allocation8 + $0x34] sm:$0xf]
    %v264 = vld [vmem:[#allocation8 + $0x38] sm:$0xf]
    %v265 = vld [vmem:[#allocation8 + $0x3c] sm:$0xf]
    %v282 = vunpack.c.l.b16 %v250
    %v283 = vunpack.c.l.b16 %v251
    %v284 = vunpack.c.l.b16 %v252
    %v285 = vunpack.c.l.b16 %v253
    %v286 = vunpack.c.l.b16 %v254
    %v287 = vunpack.c.l.b16 %v255
    %v288 = vunpack.c.l.b16 %v256
    %v289 = vunpack.c.l.b16 %v257
    %v290 = vunpack.c.l.b16 %v258
    %v291 = vunpack.c.l.b16 %v259
    %v292 = vunpack.c.l.b16 %v260
    %v293 = vunpack.c.l.b16 %v261
    %v294 = vunpack.c.l.b16 %v262
    %v295 = vunpack.c.l.b16 %v263
    %v296 = vunpack.c.l.b16 %v264
    %v297 = vunpack.c.l.b16 %v265
    %v298 = vpack.c.b16 %v283, %v282
    %v299 = vpack.c.b16 %v285, %v284
    %v300 = vpack.c.b16 %v287, %v286
    %v301 = vpack.c.b16 %v289, %v288
    %v302 = vpack.c.b16 %v291, %v290
    %v303 = vpack.c.b16 %v293, %v292
    %v304 = vpack.c.b16 %v295, %v294
    %v305 = vpack.c.b16 %v297, %v296
    %314 = vmatpush.bf16.msra.mxu0 %v305
    %315 = vmatpush.bf16.msra.mxu0 %v304
    %316 = vmatpush.bf16.msra.mxu0 %v303
    %317 = vmatpush.bf16.msra.mxu0 %v302
    %318 = vmatpush.bf16.msra.mxu0 %v301
    %319 = vmatpush.bf16.msra.mxu0 %v300
    %320 = vmatpush.bf16.msra.mxu0 %v299
    %321 = vmatpush.bf16.msra.mxu0 %v298
    %322 = vmatmul.bf16.gmra.mxu0 %v249
    %v323 = vpop.f32.mrf.mxu0
    %v324 = vadd.f32 0.0, %v323
    %v325 = vpop.f32.mrf.mxu0
    %v326 = vadd.f32 0.0, %v325
    %327 = vdwg.mxu0
    %v328 = vadd.f32 %v247, %v324
    %v329 = vadd.f32 %v248, %v326
    %330 = vst [vmem:[#allocation2] sm:$0xff] %v328
    %331 = vst [vmem:[#allocation2 + $0x8] sm:$0xff] %v329
    // Predicated region
    $region38: #{tpu_custom_call.1} parent=1 // pred_check
      %p332 = pneg %p68
    $region39: #{tpu_custom_call.1} parent=1 // pred_check_branch
      %334 = sbr.rel (%p332) target = $region41
    $region40: #{tpu_custom_call.1} parent=1 // pred_region
      %v335 = vld [vmem:[#allocation2] sm:$0xff]
      %v336 = vld [vmem:[#allocation2 + $0x8] sm:$0xff]
      %v337 = vld [vmem:[%s4] sm:$0x1]
      %v339 = vperm.slane %v337, 0
      %v341 = vadd.f32 %v335, %v339
      %v342 = vadd.f32 %v336, %v339
      %343 = vst [vmem:[#allocation9] sm:$0xff] %v341
      %344 = vst [vmem:[#allocation9 + $0x8] sm:$0xff] %v342
    $region41: #{tpu_custom_call.1} parent=1 // pred_fallthru
      _
    // Predicated region
    $region42: #{tpu_custom_call.1} parent=1 // pred_check
      _
    $region43: #{tpu_custom_call.1} parent=1 // pred_check_branch
      %346 = sbr.rel (0) target = $region45
    $region44: #{tpu_custom_call.1} parent=1 // pred_region
      %348 = vsyncadd [#allocation5], 0
      %s349 = sshll.u32 [#allocation9], 4
      %s350 = int_to_ptr.vmem [resolvable:$true] %s349
      %s351 = sshll.u32 %s5, 4
      %s352 = int_to_ptr.hbm [resolvable:$true] %s351
      %357 = dma.vmem_to_hbm [thread:$0]  %s350, 256, %s352, [#allocation5], 128, 128, 8
    $region45: #{tpu_custom_call.1} parent=1 // pred_fallthru
      _
    // Predicated region
    $region46: #{tpu_custom_call.1} parent=1 // pred_check
      _
    $region47: #{tpu_custom_call.1} parent=1 // pred_check_branch
      %359 = sbr.rel (0) target = $region49
    $region48: #{tpu_custom_call.1} parent=1 // pred_region
      %361 = dma.done [#allocation5], 256
    $region49: #{tpu_custom_call.1} parent=1 // pred_fallthru
      _
    %362 = vsyncpa [#allocation4], 1
    %363 = vsyncpa [#allocation7], 1
    %364 = vsyncpa [#allocation5], 1

</llo_original>
